<compile_context>
chip_gen: v5e
topology: v5e:2x2
jax: 0.10.0
libtpu: 0.0.40
codegen_flags: <defaults>
</compile_context>

<pallas_src>
import functools

import jax
import jax.numpy as jnp
from jax.experimental import pallas as pl
from jax.experimental.pallas import tpu as pltpu


def _round_up(x, m):
    return ((x + m - 1) // m) * m


def _gap_kernel(x_ref, o_ref, acc_ref, *, hw, hw_tile, inv_hw, mask_tail):
    # x_ref: (row_tile, hw_tile) VMEM tile. Accumulate f32 row sums over the
    # spatial (lane) axis into acc_ref, then write the per-row means as a
    # lane-dense (1, row_tile) vector on the final H*W tile.
    j = pl.program_id(1)

    @pl.when(j == 0)
    def _init():
        acc_ref[...] = jnp.zeros_like(acc_ref)

    x = x_ref[...]
    if mask_tail:
        # Last H*W tile may overhang the array: zero the out-of-bounds lanes
        # before they enter the sum (select, so garbage/NaN never propagates).
        col = j * hw_tile + jax.lax.broadcasted_iota(jnp.int32, x.shape, 1)
        x = jnp.where(col < hw, x, jnp.zeros_like(x))

    # Cast fused into the reduction: no full-tile f32 temp for bf16 inputs.
    acc_ref[...] += jnp.sum(x, axis=-1, dtype=jnp.float32)[None, :]

    @pl.when(j == pl.num_programs(1) - 1)
    def _finalize():
        o_ref[...] = (acc_ref[...] * inv_hw).astype(o_ref.dtype)


def global_avg_pool2d(x):
    """Pallas equivalent of F.avg_pool2d(x, kernel_size=x.size()[2:]).

    x: (N, C, H, W) -> (N, C, 1, 1). Accepts bf16/f32 directly; accumulation
    is always f32 in-kernel.
    """
    n, c, h, w = x.shape
    rows = n * c
    hw = h * w
    x2d = x.reshape(rows, hw)

    itemsize = jnp.dtype(x.dtype).itemsize
    sublane_pack = max(1, 4 // itemsize)        # 1 f32, 2 bf16, 4 int8/fp8
    row_align = 8 * sublane_pack                # sublane-packing-aware row tile
    hw_padded = _round_up(hw, 128)              # lane padding of each block row

    # ---- generation-aware VMEM budget ------------------------------------
    try:
        vmem_cap = int(pltpu.get_tpu_info().vmem_capacity_bytes)
    except Exception:
        vmem_cap = 64 * 1024 * 1024             # conservative (v7x per-TC)
    vmem_budget = min(48 * 1024 * 1024, (vmem_cap * 3) // 4)
    target_block_bytes = min(16 * 1024 * 1024, vmem_budget // 3)

    # ---- tile selection ---------------------------------------------------
    rows_fit = target_block_bytes // (hw_padded * itemsize)
    if rows_fit >= row_align:
        # Full spatial extent per block; tile only the (N*C) row axis.
        hw_tile = hw
        row_tile = (rows_fit // row_align) * row_align
        # Keep >= 4 row tiles when the problem is big enough so the
        # "parallel" axis can shard across v7x's two TensorCores.
        quarter = _round_up(pl.cdiv(rows, 4), row_align)
        row_tile = max(row_align, min(row_tile, quarter))
    else:
        # Spatial reduction too large for one block: tile H*W too
        # (reduction axis, marked "arbitrary") and keep a minimal row tile.
        row_tile = row_align
        hw_tile = (target_block_bytes // (row_tile * itemsize)) // 128 * 128
        hw_tile = max(128, min(hw_tile, hw_padded))
    row_tile = min(row_tile, _round_up(rows, row_align))

    num_row_tiles = pl.cdiv(rows, row_tile)
    num_hw_tiles = pl.cdiv(hw, hw_tile)
    mask_tail = (hw % hw_tile) != 0

    # Explicit scoped-VMEM limit: ~2.5x the (double-buffered) input block
    # plus slack for the output/accumulator tiles. Needed on v5e (16 MiB
    # scoped default) and v6e/v7x (32 MiB) once blocks grow to 8-16 MiB.
    block_in_bytes = row_tile * _round_up(hw_tile, 128) * itemsize
    vmem_limit = int(min(vmem_budget,
                         max(16 * 1024 * 1024,
                             (block_in_bytes * 5) // 2 + (4 << 20))))

    kernel = functools.partial(
        _gap_kernel, hw=hw, hw_tile=hw_tile,
        inv_hw=1.0 / float(hw), mask_tail=mask_tail)

    out2d = pl.pallas_call(
        kernel,
        out_shape=jax.ShapeDtypeStruct((num_row_tiles, row_tile), x.dtype),
        grid_spec=pltpu.PrefetchScalarGridSpec(
            num_scalar_prefetch=0,
            grid=(num_row_tiles, num_hw_tiles),
            in_specs=[pl.BlockSpec((row_tile, hw_tile), lambda i, j: (i, j))],
            out_specs=pl.BlockSpec((1, row_tile), lambda i, j: (i, 0)),
            scratch_shapes=[pltpu.VMEM((1, row_tile), jnp.float32)],
        ),
        compiler_params=pltpu.CompilerParams(
            dimension_semantics=("parallel", "arbitrary"),
            vmem_limit_bytes=vmem_limit,
        ),
        cost_estimate=pl.CostEstimate(
            flops=rows * hw,
            transcendentals=0,
            bytes_accessed=rows * hw * itemsize + rows * itemsize,
        ),
    )(x2d)

    # Ragged last row tile: boundary-block garbage lives only in rows >= rows
    # of the flattened output and is discarded here (no input padding pass).
    out = out2d.reshape(num_row_tiles * row_tile)[:rows]
    return out.reshape(n, c, 1, 1)


if __name__ == "__main__":
    key = jax.random.PRNGKey(0)
    # Small NCHW input consistent with the module's forward: (N=2, C=4, H=16, W=16)
    x = jax.random.normal(key, (2, 4, 16, 16), dtype=jnp.float32)

    out = global_avg_pool2d(x)
    out = jax.block_until_ready(out)

    # Sanity check against plain-JAX reference.
    ref = jnp.mean(x, axis=(2, 3), keepdims=True)
    assert out.shape == (2, 4, 1, 1)
    assert jnp.allclose(out, ref, atol=1e-6, rtol=1e-6)

    print("KERNEL_OK")
</pallas_src>

<mosaic_0001>
module attributes {stable_mosaic.version = 11 : i64} {
  func.func @_gap_kernel(%arg0: i32, %arg1: i32, %arg2: memref<8x256xf32, #tpu.memory_space<vmem>>, %arg3: memref<1x8xf32, #tpu.memory_space<vmem>>, %arg4: memref<1x8xf32, #tpu.memory_space<vmem>>) attributes {dimension_semantics = [#tpu.dimension_semantics<parallel>, #tpu.dimension_semantics<arbitrary>], iteration_bounds = array<i64: 1, 1>, scalar_prefetch = 0 : i64, scratch_operands = 1 : i64, tpu.core_type = #tpu.core_type<tc>, window_params = [{transform_indices = @transform_0, window_bounds = array<i64: 8, 256>}, {transform_indices = @transform_1, window_bounds = array<i64: 1, 8>}]} {
    %c0_i32 = arith.constant 0 : i32
    %0 = arith.cmpi eq, %arg1, %c0_i32 : i32
    %1 = arith.extui %0 : i1 to i32
    %c0_i32_0 = arith.constant 0 : i32
    %2 = arith.cmpi ne, %1, %c0_i32_0 : i32
    scf.if %2 {
      %cst_8 = arith.constant 0.000000e+00 : f32
      %12 = vector.broadcast %cst_8 : f32 to vector<1x8xf32>
      %c0_9 = arith.constant 0 : index
      %c0_10 = arith.constant 0 : index
      %13 = vector.load %arg4[%c0_9, %c0_10] : memref<1x8xf32, #tpu.memory_space<vmem>>, vector<1x8xf32>
      tpu.vector_store %arg4[%c0_9, %c0_10], %12 {strides = array<i32>} : memref<1x8xf32, #tpu.memory_space<vmem>>, vector<1x8xf32>,
    } else {
    }
    %c0 = arith.constant 0 : index
    %c0_1 = arith.constant 0 : index
    %3 = vector.load %arg2[%c0, %c0_1] : memref<8x256xf32, #tpu.memory_space<vmem>>, vector<8x256xf32>
    %c0_2 = arith.constant 0 : index
    %c0_3 = arith.constant 0 : index
    %4 = vector.load %arg4[%c0_2, %c0_3] : memref<1x8xf32, #tpu.memory_space<vmem>>, vector<1x8xf32>
    %cst = arith.constant dense<0.000000e+00> : vector<8xf32>
    %5 = vector.multi_reduction <add>, %3, %cst [1] : vector<8x256xf32> to vector<8xf32>
    %6 = vector.shape_cast %5 : vector<8xf32> to vector<1x8xf32>
    %7 = arith.addf %4, %6 : vector<1x8xf32>
    %c0_4 = arith.constant 0 : index
    %c0_5 = arith.constant 0 : index
    %8 = vector.load %arg4[%c0_4, %c0_5] : memref<1x8xf32, #tpu.memory_space<vmem>>, vector<1x8xf32>
    tpu.vector_store %arg4[%c0_4, %c0_5], %7 {strides = array<i32>} : memref<1x8xf32, #tpu.memory_space<vmem>>, vector<1x8xf32>,
    %c0_i32_6 = arith.constant 0 : i32
    %9 = arith.cmpi eq, %arg1, %c0_i32_6 : i32
    %10 = arith.extui %9 : i1 to i32
    %c0_i32_7 = arith.constant 0 : i32
    %11 = arith.cmpi ne, %10, %c0_i32_7 : i32
    scf.if %11 {
      %c0_8 = arith.constant 0 : index
      %c0_9 = arith.constant 0 : index
      %12 = vector.load %arg4[%c0_8, %c0_9] : memref<1x8xf32, #tpu.memory_space<vmem>>, vector<1x8xf32>
      %cst_10 = arith.constant 3.906250e-03 : f32
      %13 = vector.broadcast %cst_10 : f32 to vector<1x8xf32>
      %14 = arith.mulf %12, %13 : vector<1x8xf32>
      %c0_11 = arith.constant 0 : index
      %c0_12 = arith.constant 0 : index
      %15 = vector.load %arg3[%c0_11, %c0_12] : memref<1x8xf32, #tpu.memory_space<vmem>>, vector<1x8xf32>
      tpu.vector_store %arg3[%c0_11, %c0_12], %14 {strides = array<i32>} : memref<1x8xf32, #tpu.memory_space<vmem>>, vector<1x8xf32>,
    } else {
    }
    return
  }
  func.func @transform_0(%arg0: i32, %arg1: i32) -> (i32, i32) {
    %c0_i32 = arith.constant 0 : i32
    return %arg0, %arg1 : i32, i32
  }
  func.func @transform_1(%arg0: i32, %arg1: i32) -> (i32, i32) {
    %c0_i32 = arith.constant 0 : i32
    %c0_i32_0 = arith.constant 0 : i32
    return %arg0, %c0_i32 : i32, i32
  }
}

</mosaic_0001>

<llo_original>
// kernel: tpu_custom_call.1
$region0: #{tpu_custom_call.1}
  #allocation0 [shape = 'u32[]', space=smem, size = 0x4, offset = 0x4, fixed_abs, tag = 'smem constant byte address 0x4 - core index']
  #allocation1 [shape = 'u32[72,128]{1,0:T(1,128)}', space=vmem, size = 0x9000, scoped, tag = 'internal scratch']
  #allocation2 [shape = 'f32[1,8]{1,0:T(1,128)}', space=vmem, size = 0x200, scoped, tag = 'scratch operand']
  %s0 = inlined_call_operand.hbm [shape: f32[8,256], index: 0, kind: input, shape index: {}]
  %s1 = inlined_call_operand.hbm [shape: f32[1,8], index: 1, kind: output, shape index: {}]
  %s2 = sld [smem:[#allocation0]]
  $region26: #{tpu_custom_call.1} parent=0
    _
  %s4 = ssub.s32 1, %s2
  %s5 = scalar_select 0, %s4, %s2
  $region1: #{tpu_custom_call.1} parent=0
    #allocation3 [shape = 'u8[8192]{0}', space=vmem, size = 0x2000, scoped, tag = 'input window, operand 0, single buffered']
    #allocation4 [shape = 's32[1]{0}', space=sflag, size = 0x4, scoped, tag = 'scoped memory for tpu_custom_call.1']
    #allocation5 [shape = 's32[1]{0}', space=sflag, size = 0x4, scoped, tag = 'scoped memory for tpu_custom_call.1']
    #allocation6 [shape = 'u8[512]{0}', space=vmem, size = 0x400, scoped, tag = 'output window, operand 0, single buffered']
    %6 = vsyncpa [#allocation4], 0
    %7 = vsyncpa [#allocation5], 0
    // Predicated region
    $region2: #{tpu_custom_call.1} parent=1 // pred_check
      _
    $region3: #{tpu_custom_call.1} parent=1 // pred_check_branch
      %9 = sbr.rel (0) target = $region5
    $region4: #{tpu_custom_call.1} parent=1 // pred_region
      %11 = vsyncadd [#allocation4], 0
      %s13 = sshll.u32 %s0, 4
      %s14 = int_to_ptr.hbm [resolvable:$true] %s13
      %s15 = sshll.u32 [#allocation3], 4
      %s16 = int_to_ptr.vmem [resolvable:$true] %s15
      %18 = dma.hbm_to_vmem [thread:$0]  %s14, 256, %s16, [#allocation4]
    $region5: #{tpu_custom_call.1} parent=1 // pred_fallthru
      _
    // Predicated region
    $region6: #{tpu_custom_call.1} parent=1 // pred_check
      _
    $region7: #{tpu_custom_call.1} parent=1 // pred_check_branch
      %20 = sbr.rel (0) target = $region9
    $region8: #{tpu_custom_call.1} parent=1 // pred_region
      %22 = dma.done [#allocation4], 256
    $region9: #{tpu_custom_call.1} parent=1 // pred_fallthru
      _
    %p23 = scmp.eq.s32.totalorder 0, 0
    // Predicated region
    $region10: #{tpu_custom_call.1} parent=1 // pred_check
      %p24 = pneg %p23
    $region11: #{tpu_custom_call.1} parent=1 // pred_check_branch
      %26 = sbr.rel (%p24) target = $region13
    $region12: #{tpu_custom_call.1} parent=1 // pred_region
      %vm27 = vcmask 57344
      %28 = vst.msk [vmem:[#allocation2] sm:$0x1] %vm27, 0.0
    $region13: #{tpu_custom_call.1} parent=1 // pred_fallthru
      _
    %v29 = vld [vmem:[#allocation3] sm:$0xff]
    %v30 = vld [vmem:[#allocation3 + $0x8] sm:$0xff]
    %v31 = vld [vmem:[#allocation2] sm:$0x1]
    %v32 = vadd.f32 %v29, %v30
    %33 = vadd.xlane.f32.xlu0 %v32
    %v34 = vpop.xlane.xlu0 %33
    %v36 = vperm.slane %v34, 0
    %v37 = vperm.slane %v34, 1
    %v38 = vperm.slane %v34, 2
    %v39 = vperm.slane %v34, 3
    %v40 = vperm.slane %v34, 4
    %v41 = vperm.slane %v34, 5
    %v42 = vperm.slane %v34, 6
    %v43 = vperm.slane %v34, 7
    %44 = vst [vmem:[#allocation1] ss:$9 sm:$0xff] %v36
    %s45 = scalar_lea.vmem [#allocation1], 1
    %46 = vst [vmem:[%s45] ss:$9 sm:$0xff] %v37
    %s47 = scalar_lea.vmem [#allocation1], 2
    %48 = vst [vmem:[%s47] ss:$9 sm:$0xff] %v38
    %s49 = scalar_lea.vmem [#allocation1], 3
    %50 = vst [vmem:[%s49] ss:$9 sm:$0xff] %v39
    %s51 = scalar_lea.vmem [#allocation1], 4
    %52 = vst [vmem:[%s51] ss:$9 sm:$0xff] %v40
    %s53 = scalar_lea.vmem [#allocation1], 5
    %54 = vst [vmem:[%s53] ss:$9 sm:$0xff] %v41
    %s55 = scalar_lea.vmem [#allocation1], 6
    %56 = vst [vmem:[%s55] ss:$9 sm:$0xff] %v42
    %s57 = scalar_lea.vmem [#allocation1], 7
    %58 = vst [vmem:[%s57] ss:$9 sm:$0xff] %v43
    %v59 = vld [vmem:[#allocation1] sm:$0xff]
    %60 = vset.pattern.permute.xlu0 0
    %61 = vperm.xlu0 %60, %v59
    %v62 = vpop.permute.xlu0 %61
    %v63 = vlaneseq
    %v64 = vand.u32 %v63, 127
    %v65 = vperm.slane %v62, %v64
    %v67 = vadd.f32 %v31, %v65
    %vm68 = vcmask 57344
    %69 = vst.msk [vmem:[#allocation2] sm:$0x1] %vm68, %v67
    // Predicated region
    $region14: #{tpu_custom_call.1} parent=1 // pred_check
      %p70 = pneg %p23
    $region15: #{tpu_custom_call.1} parent=1 // pred_check_branch
      %72 = sbr.rel (%p70) target = $region17
    $region16: #{tpu_custom_call.1} parent=1 // pred_region
      %v73 = vld [vmem:[#allocation2] sm:$0x1]
      %v74 = vmul.f32 %v73, 0.00390625
      %75 = vst.msk [vmem:[#allocation6] sm:$0x1] %vm68, %v74
    $region17: #{tpu_custom_call.1} parent=1 // pred_fallthru
      _
    // Predicated region
    $region18: #{tpu_custom_call.1} parent=1 // pred_check
      _
    $region19: #{tpu_custom_call.1} parent=1 // pred_check_branch
      %77 = sbr.rel (0) target = $region21
    $region20: #{tpu_custom_call.1} parent=1 // pred_region
      %79 = vsyncadd [#allocation5], 0
      %s81 = sshll.u32 [#allocation6], 4
      %s82 = int_to_ptr.vmem [resolvable:$true] %s81
      %s83 = sshll.u32 %s1, 4
      %s84 = int_to_ptr.hbm [resolvable:$true] %s83
      %86 = dma.vmem_to_hbm [thread:$0]  %s82, 16, %s84, [#allocation5]
    $region21: #{tpu_custom_call.1} parent=1 // pred_fallthru
      _
    // Predicated region
    $region22: #{tpu_custom_call.1} parent=1 // pred_check
      _
    $region23: #{tpu_custom_call.1} parent=1 // pred_check_branch
      %88 = sbr.rel (0) target = $region25
    $region24: #{tpu_custom_call.1} parent=1 // pred_region
      %90 = dma.done [#allocation5], 16
    $region25: #{tpu_custom_call.1} parent=1 // pred_fallthru
      _
    %91 = vsyncpa [#allocation4], 1
    %92 = vsyncpa [#allocation5], 1

</llo_original>
